<compile_context>
chip_gen: v5e
topology: v5e:2x2
jax: 0.10.0
libtpu: 0.0.40
codegen_flags: <defaults>
</compile_context>

<pallas_src>
import functools

import jax
import jax.numpy as jnp
from jax import lax
from jax.experimental import pallas as pl
from jax.experimental.pallas import tpu as pltpu


def _round_up(a, b):
    return -(-a // b) * b


def _maxpool_kernel(x_ref, o_ref, pad_ref, *, kernel_size, stride, pad_left,
                    length, out_len):
    """One (TILE_R, L) block -> one (TILE_R, L_out) block.

    x_ref  : (tile_r, length)   natural-layout input rows (N*C on sublanes)
    o_ref  : (tile_r, out_len)  natural-layout pooled rows
    pad_ref: (l_pad, tile_r)    VMEM staging buffer: zero-padded + transposed
    """
    tile_r = pad_ref.shape[1]
    pad_right = pad_ref.shape[0] - pad_left - length

    # Fold the F.pad zero padding into the kernel: zero the (few) boundary
    # rows of the staging buffer and drop the transposed block in between.
    # Zero padding (not -inf) matches F.pad + MaxPool1d semantics exactly.
    if pad_left:
        pad_ref[:pad_left, :] = jnp.zeros((pad_left, tile_r), pad_ref.dtype)
    if pad_right:
        pad_ref[pad_left + length:, :] = jnp.zeros((pad_right, tile_r),
                                                   pad_ref.dtype)
    pad_ref[pad_left:pad_left + length, :] = x_ref[...].T

    def tap(k):
        # Window tap k of every output position via one sublane-(strided) read.
        # Max index touched: k + (out_len-1)*stride <= l_pad - 1 (in bounds).
        if stride == 1:
            return pad_ref[pl.ds(k, out_len), :]
        return pad_ref[pl.ds(k, out_len, stride=stride), :]

    acc = tap(0)
    for k in range(1, kernel_size):       # static unroll; kernel_size is tiny
        acc = jnp.maximum(acc, tap(k))    # full-vreg VPU max

    # Transpose the small accumulator once so the output leaves the kernel in
    # its natural (rows, pooled-length) layout -> no wrapper transpose pass.
    o_ref[...] = acc.T


def maxpool_same_padding(x, *, input_channels, kernel_size, stride):
    """x: (N, C, L) array — same NCL convention as torch's MaxPool1d input."""
    if kernel_size < 1 or stride < 1:
        raise ValueError("kernel_size and stride must be >= 1")

    n, c, l = x.shape
    r = n * c
    itemsize = jnp.dtype(x.dtype).itemsize

    # Exact replica of the module's padding arithmetic (zero padding).
    padding = kernel_size - stride - input_channels % stride
    while padding < 0:
        padding += stride
    pad_left = padding - padding // 2
    l_pad = l + padding
    if l_pad < kernel_size:
        raise ValueError(f"padded length {l_pad} < kernel_size {kernel_size}")
    l_out = (l_pad - kernel_size) // stride + 1     # MaxPool1d output length

    # ---- generation-aware VMEM budget ------------------------------------
    try:
        vmem_cap = pltpu.get_tpu_info().vmem_capacity_bytes
    except Exception:                     # robust off-TPU / older runtimes
        vmem_cap = 64 * 1024 * 1024
    if vmem_cap >= 128 * 1024 * 1024:     # v5e / v6e: 128 MiB physical VMEM
        vmem_budget, vmem_limit = 48 * 1024 * 1024, 64 * 1024 * 1024
    else:                                 # v7x (64 MiB per TC) / unknown
        vmem_budget, vmem_limit = 20 * 1024 * 1024, 32 * 1024 * 1024

    # ---- R-tile sizing ----------------------------------------------------
    lane_l = _round_up(l, 128)       # VMEM lane footprint of an input row
    lane_o = _round_up(l_out, 128)   # VMEM lane footprint of an output row
    sub_lp = _round_up(l_pad, 8)     # sublane footprint of the staging buffer
    # Per R-row VMEM: 2 double-buffered input blocks + 2 output blocks,
    # the staging buffer, plus slack for the transpose temporaries.
    per_row = itemsize * (2 * lane_l + 2 * lane_o + 2 * sub_lp + lane_o)

    r8 = _round_up(r, 8)
    max_rows = max(8, (vmem_budget // per_row) // 8 * 8)

    if r8 <= 256:
        tile_r = min(r8, max_rows)                 # tiny problem: 1-2 blocks
    elif max_rows < 128:
        tile_r = max_rows                          # very long L: VMEM-limited
    else:
        cap = min(4096, (max_rows // 128) * 128)   # raised cap (was 1024)
        # Aim for >=4 pipelined grid steps, but never below ~1 MiB of HBM
        # traffic per step (amortizes the ~0.35 us per-step overhead).
        rows_1mib = _round_up(
            max(1, (1 << 20) // max(1, (l + l_out) * itemsize)), 128)
        want = max(128, rows_1mib, _round_up(pl.cdiv(r8, 4), 128))
        tile_r = max(128, min(cap, want, _round_up(r8, 128)))

    grid_r = pl.cdiv(r, tile_r)

    kernel = functools.partial(
        _maxpool_kernel, kernel_size=kernel_size, stride=stride,
        pad_left=pad_left, length=l, out_len=l_out)

    # Natural layouts in and out: these reshapes only merge/split the leading
    # (N, C) dims and are metadata-only (no HBM copy).
    x2 = x.reshape(r, l)

    out2 = pl.pallas_call(
        kernel,
        out_shape=jax.ShapeDtypeStruct((r, l_out), x.dtype),
        grid=(grid_r,),
        in_specs=[pl.BlockSpec((tile_r, l), lambda i: (i, 0))],
        out_specs=pl.BlockSpec((tile_r, l_out), lambda i: (i, 0)),
        scratch_shapes=[pltpu.VMEM((l_pad, tile_r), x.dtype)],
        compiler_params=pltpu.CompilerParams(
            # NOTE: on v7x, pltpu.CORE_PARALLEL on this axis (with grid_r even)
            # would shard this memory-bound loop across both TensorCores.
            dimension_semantics=("parallel",),
            vmem_limit_bytes=vmem_limit,
        ),
        cost_estimate=pl.CostEstimate(
            flops=(kernel_size - 1) * l_out * r,
            transcendentals=0,
            bytes_accessed=(l + l_out) * r * itemsize,
        ),
    )(x2)

    return out2.reshape(n, c, l_out)


if __name__ == "__main__":
    key = jax.random.PRNGKey(0)

    # Small shapes consistent with the module's forward: (N, C, L) for MaxPool1d.
    N, C, L = 2, 4, 16
    input_channels, kernel_size, stride = C, 3, 2   # module __init__ args

    x = jax.random.normal(key, (N, C, L), dtype=jnp.float32)

    out = maxpool_same_padding(
        x, input_channels=input_channels, kernel_size=kernel_size, stride=stride
    )
    out = jax.block_until_ready(out)

    # Pure-JAX reference with identical zero-padding-then-maxpool semantics.
    padding = kernel_size - stride - input_channels % stride
    while padding < 0:
        padding += stride
    x_pad = jnp.pad(
        x, ((0, 0), (0, 0), (padding - padding // 2, padding // 2))
    )
    ref = lax.reduce_window(
        x_pad, -jnp.inf, lax.max, (1, 1, kernel_size), (1, 1, stride), "VALID"
    )

    assert out.shape == ref.shape, (out.shape, ref.shape)
    assert jnp.allclose(out, ref), "Pallas maxpool mismatch vs reference"
    print("KERNEL_OK")
</pallas_src>

<mosaic_0001>
module attributes {stable_mosaic.version = 11 : i64} {
  func.func @_maxpool_kernel(%arg0: i32, %arg1: memref<8x16xf32, #tpu.memory_space<vmem>>, %arg2: memref<8x8xf32, #tpu.memory_space<vmem>>, %arg3: memref<17x8xf32, #tpu.memory_space<vmem>>) attributes {dimension_semantics = [#tpu.dimension_semantics<parallel>], iteration_bounds = array<i64: 1>, scalar_prefetch = 0 : i64, scratch_operands = 1 : i64, tpu.core_type = #tpu.core_type<tc>, window_params = [{transform_indices = @transform_0, window_bounds = array<i64: 8, 16>}, {transform_indices = @transform_1, window_bounds = array<i64: 8, 8>}]} {
    %cst = arith.constant 0.000000e+00 : f32
    %0 = vector.broadcast %cst : f32 to vector<1x8xf32>
    %c0 = arith.constant 0 : index
    %c0_0 = arith.constant 0 : index
    %1 = vector.load %arg3[%c0, %c0_0] : memref<17x8xf32, #tpu.memory_space<vmem>>, vector<1x8xf32>
    tpu.vector_store %arg3[%c0, %c0_0], %0 {strides = array<i32>} : memref<17x8xf32, #tpu.memory_space<vmem>>, vector<1x8xf32>,
    %c0_1 = arith.constant 0 : index
    %c0_2 = arith.constant 0 : index
    %2 = vector.load %arg1[%c0_1, %c0_2] : memref<8x16xf32, #tpu.memory_space<vmem>>, vector<8x16xf32>
    %3 = tpu.transpose %2, [1, 0] : vector<8x16xf32> -> vector<16x8xf32>
    %c1 = arith.constant 1 : index
    %c0_3 = arith.constant 0 : index
    %4 = vector.load %arg3[%c1, %c0_3] : memref<17x8xf32, #tpu.memory_space<vmem>>, vector<16x8xf32>
    tpu.vector_store %arg3[%c1, %c0_3], %3 {strides = array<i32>} : memref<17x8xf32, #tpu.memory_space<vmem>>, vector<16x8xf32>,
    %c0_4 = arith.constant 0 : index
    %c0_5 = arith.constant 0 : index
    %5 = tpu.strided_load %arg3[%c0_4, %c0_5] {strides = array<i32: 2, 1>} : memref<17x8xf32, #tpu.memory_space<vmem>>, vector<8x8xf32>
    %c1_6 = arith.constant 1 : index
    %c0_7 = arith.constant 0 : index
    %6 = tpu.strided_load %arg3[%c1_6, %c0_7] {strides = array<i32: 2, 1>} : memref<17x8xf32, #tpu.memory_space<vmem>>, vector<8x8xf32>
    %7 = arith.maximumf %5, %6 : vector<8x8xf32>
    %c2 = arith.constant 2 : index
    %c0_8 = arith.constant 0 : index
    %8 = tpu.strided_load %arg3[%c2, %c0_8] {strides = array<i32: 2, 1>} : memref<17x8xf32, #tpu.memory_space<vmem>>, vector<8x8xf32>
    %9 = arith.maximumf %7, %8 : vector<8x8xf32>
    %10 = tpu.transpose %9, [1, 0] : vector<8x8xf32> -> vector<8x8xf32>
    %c0_9 = arith.constant 0 : index
    %c0_10 = arith.constant 0 : index
    %11 = vector.load %arg2[%c0_9, %c0_10] : memref<8x8xf32, #tpu.memory_space<vmem>>, vector<8x8xf32>
    tpu.vector_store %arg2[%c0_9, %c0_10], %10 {strides = array<i32>} : memref<8x8xf32, #tpu.memory_space<vmem>>, vector<8x8xf32>,
    return
  }
  func.func @transform_0(%arg0: i32) -> (i32, i32) {
    %c0_i32 = arith.constant 0 : i32
    %c0_i32_0 = arith.constant 0 : i32
    return %arg0, %c0_i32 : i32, i32
  }
  func.func @transform_1(%arg0: i32) -> (i32, i32) {
    %c0_i32 = arith.constant 0 : i32
    %c0_i32_0 = arith.constant 0 : i32
    return %arg0, %c0_i32 : i32, i32
  }
}

</mosaic_0001>

<llo_original>
// kernel: tpu_custom_call.1
$region0: #{tpu_custom_call.1}
  #allocation0 [shape = 'u32[]', space=smem, size = 0x4, offset = 0x4, fixed_abs, tag = 'smem constant byte address 0x4 - core index']
  #allocation1 [shape = 'u32[72,128]{1,0:T(1,128)}', space=vmem, size = 0x9000, scoped, tag = 'internal scratch']
  #allocation2 [shape = 'f32[17,8]{1,0:T(8,128)}', space=vmem, size = 0x3000, scoped, tag = 'scratch operand']
  %s0 = inlined_call_operand.hbm [shape: f32[8,16], index: 0, kind: input, shape index: {}]
  %s1 = inlined_call_operand.hbm [shape: f32[8,8], index: 1, kind: output, shape index: {}]
  %s2 = sld [smem:[#allocation0]]
  $region18: #{tpu_custom_call.1} parent=0
    _
  %s4 = ssub.s32 1, %s2
  %s5 = scalar_select 0, %s4, %s2
  $region1: #{tpu_custom_call.1} parent=0
    #allocation3 [shape = 'u8[4096]{0}', space=vmem, size = 0x1000, scoped, tag = 'input window, operand 0, single buffered']
    #allocation4 [shape = 's32[1]{0}', space=sflag, size = 0x4, scoped, tag = 'scoped memory for tpu_custom_call.1']
    #allocation5 [shape = 's32[1]{0}', space=sflag, size = 0x4, scoped, tag = 'scoped memory for tpu_custom_call.1']
    #allocation6 [shape = 'u8[4096]{0}', space=vmem, size = 0x1000, scoped, tag = 'output window, operand 0, single buffered']
    %6 = vsyncpa [#allocation4], 0
    %7 = vsyncpa [#allocation5], 0
    // Predicated region
    $region2: #{tpu_custom_call.1} parent=1 // pred_check
      _
    $region3: #{tpu_custom_call.1} parent=1 // pred_check_branch
      %9 = sbr.rel (0) target = $region5
    $region4: #{tpu_custom_call.1} parent=1 // pred_region
      %11 = vsyncadd [#allocation4], 0
      %s13 = sshll.u32 %s0, 4
      %s14 = int_to_ptr.hbm [resolvable:$true] %s13
      %s15 = sshll.u32 [#allocation3], 4
      %s16 = int_to_ptr.vmem [resolvable:$true] %s15
      %18 = dma.hbm_to_vmem [thread:$0]  %s14, 128, %s16, [#allocation4]
    $region5: #{tpu_custom_call.1} parent=1 // pred_fallthru
      _
    // Predicated region
    $region6: #{tpu_custom_call.1} parent=1 // pred_check
      _
    $region7: #{tpu_custom_call.1} parent=1 // pred_check_branch
      %20 = sbr.rel (0) target = $region9
    $region8: #{tpu_custom_call.1} parent=1 // pred_region
      %22 = dma.done [#allocation4], 128
    $region9: #{tpu_custom_call.1} parent=1 // pred_fallthru
      _
    %vm23 = vcmask 57344
    %24 = vst.msk [vmem:[#allocation2] sm:$0x1] %vm23, 0.0
    %v25 = vld [vmem:[#allocation3] sm:$0xff]
    %26 = vxpose.xlu0.b32.start [1/16] %v25, 128
    %27 = vxpose.xlu0.b32.cont [2/16] 0.0, 128
    %28 = vxpose.xlu0.b32.cont [3/16] 0.0, 128
    %29 = vxpose.xlu0.b32.cont [4/16] 0.0, 128
    %30 = vxpose.xlu0.b32.cont [5/16] 0.0, 128
    %31 = vxpose.xlu0.b32.cont [6/16] 0.0, 128
    %32 = vxpose.xlu0.b32.cont [7/16] 0.0, 128
    %33 = vxpose.xlu0.b32.cont [8/16] 0.0, 128
    %34 = vxpose.xlu0.b32.cont [9/16] 0.0, 128
    %35 = vxpose.xlu0.b32.cont [10/16] 0.0, 128
    %36 = vxpose.xlu0.b32.cont [11/16] 0.0, 128
    %37 = vxpose.xlu0.b32.cont [12/16] 0.0, 128
    %38 = vxpose.xlu0.b32.cont [13/16] 0.0, 128
    %39 = vxpose.xlu0.b32.cont [14/16] 0.0, 128
    %40 = vxpose.xlu0.b32.cont [15/16] 0.0, 128
    %41 = vxpose.xlu0.b32.end [16/16] 0.0, 128
    %v42 = vpop.trf.xlu0
    %v43 = vpop.trf.xlu0
    %v44 = vpop.trf.xlu0
    %v45 = vpop.trf.xlu0
    %v46 = vpop.trf.xlu0
    %v47 = vpop.trf.xlu0
    %v48 = vpop.trf.xlu0
    %v49 = vpop.trf.xlu0
    %v50 = vpop.trf.xlu0
    %v51 = vpop.trf.xlu0
    %v52 = vpop.trf.xlu0
    %v53 = vpop.trf.xlu0
    %v54 = vpop.trf.xlu0
    %v55 = vpop.trf.xlu0
    %v56 = vpop.trf.xlu0
    %v57 = vpop.trf.xlu0
    %vm58 = vcmask 64512
    %59 = vst.msk [vmem:[#allocation2 + $0x1] sm:$0xff] %vm58, %v42
    %60 = vst.msk [vmem:[#allocation2 + $0x9] sm:$0xff] %vm58, %v43
    %v61 = vld [vmem:[#allocation2] ss:$2 sm:$0xff]
    %s62 = scalar_lea.vmem [#allocation2], 1
    %v63 = vld [vmem:[%s62] ss:$2 sm:$0xff]
    %v64 = vmax.f32 %v61, %v63
    %s65 = scalar_lea.vmem [#allocation2], 2
    %v66 = vld [vmem:[%s65] ss:$2 sm:$0xff]
    %v67 = vmax.f32 %v64, %v66
    %68 = vxpose.xlu0.b32.start [1/16] %v67, 128
    %69 = vxpose.xlu0.b32.cont [2/16] 0.0, 128
    %70 = vxpose.xlu0.b32.cont [3/16] 0.0, 128
    %71 = vxpose.xlu0.b32.cont [4/16] 0.0, 128
    %72 = vxpose.xlu0.b32.cont [5/16] 0.0, 128
    %73 = vxpose.xlu0.b32.cont [6/16] 0.0, 128
    %74 = vxpose.xlu0.b32.cont [7/16] 0.0, 128
    %75 = vxpose.xlu0.b32.cont [8/16] 0.0, 128
    %76 = vxpose.xlu0.b32.cont [9/16] 0.0, 128
    %77 = vxpose.xlu0.b32.cont [10/16] 0.0, 128
    %78 = vxpose.xlu0.b32.cont [11/16] 0.0, 128
    %79 = vxpose.xlu0.b32.cont [12/16] 0.0, 128
    %80 = vxpose.xlu0.b32.cont [13/16] 0.0, 128
    %81 = vxpose.xlu0.b32.cont [14/16] 0.0, 128
    %82 = vxpose.xlu0.b32.cont [15/16] 0.0, 128
    %83 = vxpose.xlu0.b32.end [16/16] 0.0, 128
    %v84 = vpop.trf.xlu0
    %v85 = vpop.trf.xlu0
    %v86 = vpop.trf.xlu0
    %v87 = vpop.trf.xlu0
    %v88 = vpop.trf.xlu0
    %v89 = vpop.trf.xlu0
    %v90 = vpop.trf.xlu0
    %v91 = vpop.trf.xlu0
    %v92 = vpop.trf.xlu0
    %v93 = vpop.trf.xlu0
    %v94 = vpop.trf.xlu0
    %v95 = vpop.trf.xlu0
    %v96 = vpop.trf.xlu0
    %v97 = vpop.trf.xlu0
    %v98 = vpop.trf.xlu0
    %v99 = vpop.trf.xlu0
    %100 = vst.msk [vmem:[#allocation6] sm:$0xff] %vm58, %v84
    // Predicated region
    $region10: #{tpu_custom_call.1} parent=1 // pred_check
      _
    $region11: #{tpu_custom_call.1} parent=1 // pred_check_branch
      %102 = sbr.rel (0) target = $region13
    $region12: #{tpu_custom_call.1} parent=1 // pred_region
      %104 = vsyncadd [#allocation5], 0
      %s106 = sshll.u32 [#allocation6], 4
      %s107 = int_to_ptr.vmem [resolvable:$true] %s106
      %s108 = sshll.u32 %s1, 4
      %s109 = int_to_ptr.hbm [resolvable:$true] %s108
      %111 = dma.vmem_to_hbm [thread:$0]  %s107, 128, %s109, [#allocation5]
    $region13: #{tpu_custom_call.1} parent=1 // pred_fallthru
      _
    // Predicated region
    $region14: #{tpu_custom_call.1} parent=1 // pred_check
      _
    $region15: #{tpu_custom_call.1} parent=1 // pred_check_branch
      %113 = sbr.rel (0) target = $region17
    $region16: #{tpu_custom_call.1} parent=1 // pred_region
      %115 = dma.done [#allocation5], 128
    $region17: #{tpu_custom_call.1} parent=1 // pred_fallthru
      _
    %116 = vsyncpa [#allocation4], 1
    %117 = vsyncpa [#allocation5], 1

</llo_original>
